<compile_context>
chip_gen: v7x
topology: tpu7x:2x2x1
jax: 0.10.0
libtpu: 0.0.40
codegen_flags: <defaults>
</compile_context>

<pallas_src>
import functools
import math

import jax
import jax.numpy as jnp
from jax.experimental import pallas as pl
from jax.experimental.pallas import tpu as pltpu

_LANES = 128


def _pow_const(x, gamma):
    """x ** gamma for x >= 0 with compile-time specialization (no exp/log pow)."""
    if float(gamma).is_integer() and 0.0 <= gamma <= 8.0:
        n = int(gamma)
        if n == 0:
            return jnp.ones_like(x)
        r = x
        for _ in range(n - 1):
            r = r * x
        return r
    if float(2.0 * gamma).is_integer() and gamma > 0.0:
        # Half-integer exponent: x^g = x^floor(g) * sqrt(x)  (1 EUP + muls).
        n = int(gamma)
        r = jnp.sqrt(x)
        for _ in range(n):
            r = r * x
        return r
    return jnp.power(x, gamma)


def _focal_dice_kernel(p_ref, t_ref, out_ref, *, alpha, gamma, valid_n, tile_r,
                       need_mask, binary_targets):
    c = pl.program_id(1)

    @pl.when(c == 0)
    def _():
        out_ref[...] = jnp.zeros_like(out_ref)

    p = p_ref[0].astype(jnp.float32)           # (tile_r, 128)
    t = t_ref[0].astype(jnp.float32)

    if need_mask:
        # Mask elements past the true per-sample element count (covers both the
        # lane-pad tail and the partial last block's garbage rows).
        row = jax.lax.broadcasted_iota(jnp.int32, (tile_r, _LANES), 0)
        lane = jax.lax.broadcasted_iota(jnp.int32, (tile_r, _LANES), 1)
        limit = valid_n - c * (tile_r * _LANES)
        mask = (row * _LANES + lane) < limit
        p = jnp.where(mask, p, 0.0)
        t = jnp.where(mask, t, 0.0)

    # ---- Focal term (F.binary_cross_entropy on probabilities, logs clamped at -100) ----
    if binary_targets:
        # For t in {0,1}: q is the probability assigned to the true class, so
        # bce = -clamp(log q) and pt = exp(-bce) == q  (single transcendental).
        q = t * p + (1.0 - t) * (1.0 - p)
        bce = -jnp.maximum(jnp.log(q), -100.0)
        pt = q
    else:
        log_p = jnp.maximum(jnp.log(p), -100.0)
        log_1mp = jnp.maximum(jnp.log(1.0 - p), -100.0)
        bce = -(t * log_p + (1.0 - t) * log_1mp)
        pt = jnp.exp(-bce)                      # exact for soft labels

    if alpha == 1.0:                            # trace-time specialization
        alpha_t = t
    else:
        alpha_t = (1.0 - alpha) + (2.0 * alpha - 1.0) * t

    x = jnp.maximum(1.0 - pt, 0.0)              # guard fp noise before pow
    focal = alpha_t * _pow_const(x, gamma) * bce

    # ---- Dice term (module re-applies sigmoid to the probability inputs) ----
    s = 0.5 * jnp.tanh(0.5 * p) + 0.5           # sigmoid via single EUP tanh
    if need_mask:
        s = jnp.where(mask, s, 0.0)             # masked lanes must not leak 0.5

    def vsum(a):                                # (tile_r,128) -> (8,128), pure VALU adds
        return a.reshape(tile_r // 8, 8, _LANES).sum(axis=0)

    out_ref[0, 0] += vsum(focal)                # focal partial sum
    out_ref[0, 1] += vsum(s * t)                # dice intersection partial sum
    out_ref[0, 2] += vsum(s + t)                # dice union partial sum


def focal_dice_loss(inputs, targets, *, alpha=1.0, gamma=2.5,
                    focal_weight=1.0, dice_weight=1.0, smooth=1e-6,
                    assume_binary_targets=True, tile_rows=2048):
    if inputs.shape != targets.shape:
        raise ValueError(
            f"Inputs ({inputs.shape}) and targets ({targets.shape}) must have the same shape")
    b = inputs.shape[0]
    n = int(math.prod(inputs.shape[1:]))

    # Stream inputs in their native dtype; cast to f32 inside the kernel.
    p2 = inputs.reshape(b, n)
    t2 = targets.reshape(b, n)
    if assume_binary_targets:
        t2 = t2.astype(jnp.int8)                # exact for {0,1} masks, 1 B/elem

    # ---- tiling: sublane-dense (B, rows, 128) layout, chunked along rows ----
    r = -(-n // _LANES)                         # rows of 128 lanes
    if r <= tile_rows:
        tile_r = -(-r // 8) * 8                 # single chunk, sublane aligned
        num_chunks = 1
        rows = tile_r                           # tiny row pad (< 8 rows), masked
    else:
        tile_r = max(32, (int(tile_rows) // 32) * 32)   # int8-safe (32,128) tiling
        num_chunks = -(-r // tile_r)            # last block may be partial; masked
        rows = r                                # no row padding for large arrays

    pad = rows * _LANES - n
    if pad:                                     # lane/sublane tail only (rare)
        p2 = jnp.pad(p2, ((0, 0), (0, pad)))
        t2 = jnp.pad(t2, ((0, 0), (0, pad)))
    p3 = p2.reshape(b, rows, _LANES)
    t3 = t2.reshape(b, rows, _LANES)

    need_mask = (num_chunks * tile_r * _LANES) != n

    kernel = functools.partial(
        _focal_dice_kernel, alpha=float(alpha), gamma=float(gamma),
        valid_n=n, tile_r=tile_r, need_mask=need_mask,
        binary_targets=bool(assume_binary_targets))

    elems = b * num_chunks * tile_r * _LANES
    cost = pl.CostEstimate(
        flops=22 * elems,
        transcendentals=(3 if assume_binary_targets else 5) * elems,
        bytes_accessed=int(p3.size) * p3.dtype.itemsize
        + int(t3.size) * t3.dtype.itemsize + b * 3 * 8 * _LANES * 4,
    )

    partial_sums = pl.pallas_call(
        kernel,
        out_shape=jax.ShapeDtypeStruct((b, 3, 8, _LANES), jnp.float32),
        grid_spec=pltpu.PrefetchScalarGridSpec(
            num_scalar_prefetch=0,
            grid=(b, num_chunks),
            in_specs=[
                pl.BlockSpec((1, tile_r, _LANES), lambda i, j: (i, j, 0)),
                pl.BlockSpec((1, tile_r, _LANES), lambda i, j: (i, j, 0)),
            ],
            # Per-sample lane-dense output block: acts as the resident accumulator
            # across the chunk axis and keeps batch iterations independent.
            out_specs=pl.BlockSpec((1, 3, 8, _LANES), lambda i, j: (i, 0, 0, 0)),
        ),
        compiler_params=pltpu.CompilerParams(
            dimension_semantics=("parallel", "arbitrary"),
            vmem_limit_bytes=48 * 1024 * 1024),
        cost_estimate=cost,
    )(p3, t3)

    # ---- tiny O(B) combine in plain JAX ----
    sums = jnp.sum(partial_sums, axis=(2, 3))               # (b, 3)
    fl = jnp.sum(sums[:, 0]) / (b * n)                      # mean over all elements
    inter, union = sums[:, 1], sums[:, 2]
    dice = (2.0 * inter + smooth) / (union + smooth)
    dl = 1.0 - jnp.mean(dice)
    return focal_weight * fl + dice_weight * dl


def _focal_dice_loss_ref(inputs, targets, *, alpha=1.0, gamma=2.5,
                         focal_weight=1.0, dice_weight=1.0, smooth=1e-6):
    """Pure-JAX reference mirroring the PyTorch module."""
    p = inputs.astype(jnp.float32)
    t = targets.astype(jnp.float32)
    bce = -(t * jnp.maximum(jnp.log(p), -100.0)
            + (1.0 - t) * jnp.maximum(jnp.log(1.0 - p), -100.0))
    pt = jnp.exp(-bce)
    alpha_t = alpha * t + (1.0 - alpha) * (1.0 - t)
    fl = jnp.mean(alpha_t * jnp.maximum(1.0 - pt, 0.0) ** gamma * bce)

    b = p.shape[0]
    s = jax.nn.sigmoid(p).reshape(b, -1)
    t2 = t.reshape(b, -1)
    inter = jnp.sum(s * t2, axis=-1)
    union = jnp.sum(s, axis=-1) + jnp.sum(t2, axis=-1)
    dice = (2.0 * inter + smooth) / (union + smooth)
    dl = 1.0 - jnp.mean(dice)
    return focal_weight * fl + dice_weight * dl


if __name__ == "__main__":
    key = jax.random.PRNGKey(0)
    k1, k2 = jax.random.split(key)

    # Segmentation-style inputs: NCHW probabilities and binary targets.
    B, C, H, W = 2, 4, 16, 16
    logits = jax.random.normal(k1, (B, C, H, W), dtype=jnp.float32)
    inputs = jax.nn.sigmoid(logits)  # F.binary_cross_entropy expects probs in [0, 1]
    targets = (jax.random.uniform(k2, (B, C, H, W)) > 0.5).astype(jnp.float32)

    loss = jax.block_until_ready(focal_dice_loss(inputs, targets))
    ref = _focal_dice_loss_ref(inputs, targets)
    assert jnp.isfinite(loss), "kernel produced non-finite loss"
    assert jnp.allclose(loss, ref, rtol=1e-4, atol=1e-5), (loss, ref)

    # General (soft-target safe) path on the same binary data.
    loss_g = jax.block_until_ready(
        focal_dice_loss(inputs, targets, assume_binary_targets=False))
    assert jnp.allclose(loss_g, ref, rtol=1e-4, atol=1e-5), (loss_g, ref)

    # Ragged spatial shape: exercises lane padding + in-kernel masking.
    lg2 = jax.random.normal(k1, (2, 3, 15, 17), dtype=jnp.float32)
    in2 = jax.nn.sigmoid(lg2)
    tg2 = (jax.random.uniform(k2, (2, 3, 15, 17)) > 0.5).astype(jnp.float32)
    loss2 = jax.block_until_ready(focal_dice_loss(in2, tg2))
    ref2 = _focal_dice_loss_ref(in2, tg2)
    assert jnp.allclose(loss2, ref2, rtol=1e-4, atol=1e-5), (loss2, ref2)

    # Multi-chunk grid with a partial last block (row tail masked in-kernel).
    lg3 = jax.random.normal(k1, (2, 8, 40, 40), dtype=jnp.float32)
    in3 = jax.nn.sigmoid(lg3)
    tg3 = (jax.random.uniform(k2, (2, 8, 40, 40)) > 0.5).astype(jnp.float32)
    loss3 = jax.block_until_ready(focal_dice_loss(in3, tg3, tile_rows=32))
    ref3 = _focal_dice_loss_ref(in3, tg3)
    assert jnp.allclose(loss3, ref3, rtol=1e-4, atol=1e-5), (loss3, ref3)

    print("KERNEL_OK")
</pallas_src>

<mosaic_0001>
module attributes {stable_mosaic.version = 11 : i64} {
  func.func @_focal_dice_kernel(%arg0: i32, %arg1: i32, %arg2: memref<1x8x128xf32, #tpu.memory_space<vmem>>, %arg3: memref<1x8x128xi8, #tpu.memory_space<vmem>>, %arg4: memref<1x3x8x128xf32, #tpu.memory_space<vmem>>) attributes {dimension_semantics = [#tpu.dimension_semantics<parallel>, #tpu.dimension_semantics<arbitrary>], iteration_bounds = array<i64: 2, 1>, scalar_prefetch = 0 : i64, scratch_operands = 0 : i64, tpu.core_type = #tpu.core_type<tc>, window_params = [{transform_indices = @transform_0, window_bounds = array<i64: 1, 8, 128>}, {transform_indices = @transform_1, window_bounds = array<i64: 1, 8, 128>}, {transform_indices = @transform_2, window_bounds = array<i64: 1, 3, 8, 128>}]} {
    %c0_i32 = arith.constant 0 : i32
    %0 = arith.cmpi eq, %arg1, %c0_i32 : i32
    %1 = arith.extui %0 : i1 to i32
    %c0_i32_0 = arith.constant 0 : i32
    %2 = arith.cmpi ne, %1, %c0_i32_0 : i32
    scf.if %2 {
      %cst_39 = arith.constant 0.000000e+00 : f32
      %62 = vector.broadcast %cst_39 : f32 to vector<1x3x8x128xf32>
      %c0_40 = arith.constant 0 : index
      %c0_41 = arith.constant 0 : index
      %c0_42 = arith.constant 0 : index
      %c0_43 = arith.constant 0 : index
      %63 = vector.load %arg4[%c0_40, %c0_41, %c0_42, %c0_43] : memref<1x3x8x128xf32, #tpu.memory_space<vmem>>, vector<1x3x8x128xf32>
      tpu.vector_store %arg4[%c0_40, %c0_41, %c0_42, %c0_43], %62 {strides = array<i32>} : memref<1x3x8x128xf32, #tpu.memory_space<vmem>>, vector<1x3x8x128xf32>,
    } else {
    }
    %c0 = arith.constant 0 : index
    %c0_1 = arith.constant 0 : index
    %c0_2 = arith.constant 0 : index
    %3 = vector.load %arg2[%c0, %c0_1, %c0_2] : memref<1x8x128xf32, #tpu.memory_space<vmem>>, vector<1x8x128xf32>
    %4 = vector.shape_cast %3 : vector<1x8x128xf32> to vector<8x128xf32>
    %c0_3 = arith.constant 0 : index
    %c0_4 = arith.constant 0 : index
    %c0_5 = arith.constant 0 : index
    %5 = vector.load %arg3[%c0_3, %c0_4, %c0_5] : memref<1x8x128xi8, #tpu.memory_space<vmem>>, vector<1x8x128xi8>
    %6 = vector.shape_cast %5 : vector<1x8x128xi8> to vector<8x128xi8>
    %7 = arith.sitofp %6 : vector<8x128xi8> to vector<8x128xf32>
    %8 = arith.mulf %7, %4 : vector<8x128xf32>
    %cst = arith.constant 1.000000e+00 : f32
    %9 = vector.broadcast %cst : f32 to vector<8x128xf32>
    %10 = arith.subf %9, %7 : vector<8x128xf32>
    %cst_6 = arith.constant 1.000000e+00 : f32
    %11 = vector.broadcast %cst_6 : f32 to vector<8x128xf32>
    %12 = arith.subf %11, %4 : vector<8x128xf32>
    %13 = arith.mulf %10, %12 : vector<8x128xf32>
    %14 = arith.addf %8, %13 : vector<8x128xf32>
    %15 = math.log %14 : vector<8x128xf32>
    %cst_7 = arith.constant -1.000000e+02 : f32
    %16 = vector.broadcast %cst_7 : f32 to vector<8x128xf32>
    %17 = arith.maximumf %15, %16 : vector<8x128xf32>
    %cst_8 = arith.constant 0.000000e+00 : f32
    %18 = vector.broadcast %cst_8 : f32 to vector<8x128xf32>
    %19 = arith.subf %18, %17 : vector<8x128xf32>
    %cst_9 = arith.constant 1.000000e+00 : f32
    %20 = vector.broadcast %cst_9 : f32 to vector<8x128xf32>
    %21 = arith.subf %20, %14 : vector<8x128xf32>
    %cst_10 = arith.constant 0.000000e+00 : f32
    %22 = vector.broadcast %cst_10 : f32 to vector<8x128xf32>
    %23 = arith.maximumf %21, %22 : vector<8x128xf32>
    %24 = math.sqrt %23 : vector<8x128xf32>
    %25 = arith.mulf %24, %23 : vector<8x128xf32>
    %26 = arith.mulf %25, %23 : vector<8x128xf32>
    %27 = arith.mulf %7, %26 : vector<8x128xf32>
    %28 = arith.mulf %27, %19 : vector<8x128xf32>
    %cst_11 = arith.constant 5.000000e-01 : f32
    %29 = vector.broadcast %cst_11 : f32 to vector<8x128xf32>
    %30 = arith.mulf %29, %4 : vector<8x128xf32>
    %31 = math.tanh %30 : vector<8x128xf32>
    %cst_12 = arith.constant 5.000000e-01 : f32
    %32 = vector.broadcast %cst_12 : f32 to vector<8x128xf32>
    %33 = arith.mulf %32, %31 : vector<8x128xf32>
    %cst_13 = arith.constant 5.000000e-01 : f32
    %34 = vector.broadcast %cst_13 : f32 to vector<8x128xf32>
    %35 = arith.addf %33, %34 : vector<8x128xf32>
    %c0_14 = arith.constant 0 : index
    %c0_15 = arith.constant 0 : index
    %c0_16 = arith.constant 0 : index
    %c0_17 = arith.constant 0 : index
    %36 = vector.load %arg4[%c0_14, %c0_15, %c0_16, %c0_17] : memref<1x3x8x128xf32, #tpu.memory_space<vmem>>, vector<1x1x8x128xf32>
    %37 = vector.shape_cast %36 : vector<1x1x8x128xf32> to vector<8x128xf32>
    %38 = vector.shape_cast %28 : vector<8x128xf32> to vector<1x8x128xf32>
    %cst_18 = arith.constant dense<0.000000e+00> : vector<8x128xf32>
    %39 = vector.multi_reduction <add>, %38, %cst_18 [0] : vector<1x8x128xf32> to vector<8x128xf32>
    %40 = arith.addf %37, %39 : vector<8x128xf32>
    %c0_19 = arith.constant 0 : index
    %c0_20 = arith.constant 0 : index
    %c0_21 = arith.constant 0 : index
    %c0_22 = arith.constant 0 : index
    %41 = vector.load %arg4[%c0_19, %c0_20, %c0_21, %c0_22] : memref<1x3x8x128xf32, #tpu.memory_space<vmem>>, vector<1x1x8x128xf32>
    %42 = vector.shape_cast %41 : vector<1x1x8x128xf32> to vector<8x128xf32>
    %43 = vector.shape_cast %40 : vector<8x128xf32> to vector<1x1x8x128xf32>
    tpu.vector_store %arg4[%c0_19, %c0_20, %c0_21, %c0_22], %43 {strides = array<i32>} : memref<1x3x8x128xf32, #tpu.memory_space<vmem>>, vector<1x1x8x128xf32>,
    %c0_23 = arith.constant 0 : index
    %c1 = arith.constant 1 : index
    %c0_24 = arith.constant 0 : index
    %c0_25 = arith.constant 0 : index
    %44 = vector.load %arg4[%c0_23, %c1, %c0_24, %c0_25] : memref<1x3x8x128xf32, #tpu.memory_space<vmem>>, vector<1x1x8x128xf32>
    %45 = vector.shape_cast %44 : vector<1x1x8x128xf32> to vector<8x128xf32>
    %46 = arith.mulf %35, %7 : vector<8x128xf32>
    %47 = vector.shape_cast %46 : vector<8x128xf32> to vector<1x8x128xf32>
    %cst_26 = arith.constant dense<0.000000e+00> : vector<8x128xf32>
    %48 = vector.multi_reduction <add>, %47, %cst_26 [0] : vector<1x8x128xf32> to vector<8x128xf32>
    %49 = arith.addf %45, %48 : vector<8x128xf32>
    %c0_27 = arith.constant 0 : index
    %c1_28 = arith.constant 1 : index
    %c0_29 = arith.constant 0 : index
    %c0_30 = arith.constant 0 : index
    %50 = vector.load %arg4[%c0_27, %c1_28, %c0_29, %c0_30] : memref<1x3x8x128xf32, #tpu.memory_space<vmem>>, vector<1x1x8x128xf32>
    %51 = vector.shape_cast %50 : vector<1x1x8x128xf32> to vector<8x128xf32>
    %52 = vector.shape_cast %49 : vector<8x128xf32> to vector<1x1x8x128xf32>
    tpu.vector_store %arg4[%c0_27, %c1_28, %c0_29, %c0_30], %52 {strides = array<i32>} : memref<1x3x8x128xf32, #tpu.memory_space<vmem>>, vector<1x1x8x128xf32>,
    %c0_31 = arith.constant 0 : index
    %c2 = arith.constant 2 : index
    %c0_32 = arith.constant 0 : index
    %c0_33 = arith.constant 0 : index
    %53 = vector.load %arg4[%c0_31, %c2, %c0_32, %c0_33] : memref<1x3x8x128xf32, #tpu.memory_space<vmem>>, vector<1x1x8x128xf32>
    %54 = vector.shape_cast %53 : vector<1x1x8x128xf32> to vector<8x128xf32>
    %55 = arith.addf %35, %7 : vector<8x128xf32>
    %56 = vector.shape_cast %55 : vector<8x128xf32> to vector<1x8x128xf32>
    %cst_34 = arith.constant dense<0.000000e+00> : vector<8x128xf32>
    %57 = vector.multi_reduction <add>, %56, %cst_34 [0] : vector<1x8x128xf32> to vector<8x128xf32>
    %58 = arith.addf %54, %57 : vector<8x128xf32>
    %c0_35 = arith.constant 0 : index
    %c2_36 = arith.constant 2 : index
    %c0_37 = arith.constant 0 : index
    %c0_38 = arith.constant 0 : index
    %59 = vector.load %arg4[%c0_35, %c2_36, %c0_37, %c0_38] : memref<1x3x8x128xf32, #tpu.memory_space<vmem>>, vector<1x1x8x128xf32>
    %60 = vector.shape_cast %59 : vector<1x1x8x128xf32> to vector<8x128xf32>
    %61 = vector.shape_cast %58 : vector<8x128xf32> to vector<1x1x8x128xf32>
    tpu.vector_store %arg4[%c0_35, %c2_36, %c0_37, %c0_38], %61 {strides = array<i32>} : memref<1x3x8x128xf32, #tpu.memory_space<vmem>>, vector<1x1x8x128xf32>,
    return
  }
  func.func @transform_0(%arg0: i32, %arg1: i32) -> (i32, i32, i32) {
    %c0_i32 = arith.constant 0 : i32
    %c0_i32_0 = arith.constant 0 : i32
    return %arg0, %arg1, %c0_i32 : i32, i32, i32
  }
  func.func @transform_1(%arg0: i32, %arg1: i32) -> (i32, i32, i32) {
    %c0_i32 = arith.constant 0 : i32
    %c0_i32_0 = arith.constant 0 : i32
    return %arg0, %arg1, %c0_i32 : i32, i32, i32
  }
  func.func @transform_2(%arg0: i32, %arg1: i32) -> (i32, i32, i32, i32) {
    %c0_i32 = arith.constant 0 : i32
    %c0_i32_0 = arith.constant 0 : i32
    %c0_i32_1 = arith.constant 0 : i32
    %c0_i32_2 = arith.constant 0 : i32
    return %arg0, %c0_i32, %c0_i32_0, %c0_i32_1 : i32, i32, i32, i32
  }
}

</mosaic_0001>

<llo_original>
// kernel: tpu_custom_call.1
$region0: #{tpu_custom_call.1}
  #allocation0 [shape = 'u32[]', space=smem, size = 0x4, offset = 0x4, fixed_abs, tag = 'smem constant byte address 0x4 - core index']
  #allocation1 [shape = 'u32[144,128]{1,0:T(1,128)}', space=vmem, size = 0x12000, scoped, tag = 'internal scratch']
  %s0 = inlined_call_operand.hbm [shape: f32[2,8,128], index: 0, kind: input, shape index: {}]
  %s1 = inlined_call_operand.hbm [shape: s8[2,8,128], index: 1, kind: input, shape index: {}]
  %s2 = inlined_call_operand.hbm [shape: f32[2,3,8,128], index: 2, kind: output, shape index: {}]
  %s3 = sld [smem:[#allocation0]]
  $region53: #{tpu_custom_call.1} parent=0
    _
  %s5 = ssub.s32 1, %s3
  %s6 = scalar_select 0, %s5, %s3
  $region1: #{tpu_custom_call.1} parent=0
    #allocation2 [shape = 'u8[8192]{0}', space=vmem, size = 0x2000, scoped, tag = 'input window, operand 0']
    #allocation3 [shape = 's32[2]{0}', space=sflag, size = 0x8, scoped, tag = 'scoped memory for tpu_custom_call.1']
    #allocation4 [shape = 's32[2]{0}', space=sflag, size = 0x8, scoped, tag = 'scoped memory for tpu_custom_call.1']
    #allocation5 [shape = 'u8[2048]{0}', space=vmem, size = 0x800, scoped, tag = 'input window, operand 1']
    #allocation6 [shape = 's32[2]{0}', space=sflag, size = 0x8, scoped, tag = 'scoped memory for tpu_custom_call.1']
    #allocation7 [shape = 'u8[24576]{0}', space=vmem, size = 0x6000, scoped, tag = 'output window, operand 0']
    %7 = vsyncpa [#allocation3], 0
    %s8 = scalar_lea.sflag [#allocation3], 1
    %9 = vsyncpa %s8, 0
    %10 = vsyncpa [#allocation6], 0
    %s11 = scalar_lea.sflag [#allocation6], 1
    %12 = vsyncpa %s11, 0
    %13 = vsyncpa [#allocation4], 0
    %s14 = scalar_lea.sflag [#allocation4], 1
    %15 = vsyncpa %s14, 0
    loop: start=0, step=1, limit=4
    $region2: #{tpu_custom_call.1} parent=1 // loop_pre_header
      _
    $region3: #{tpu_custom_call.1} parent=1 // loop_header
      %s17 = sphi 0, %s21
      %p18 = scmp.ge.s32.totalorder %s17, 4
      %s24 = sphi 0, %s36
      %s25 = sphi 0, %s32
      %s26 = sphi 0, %s24
      %s27 = sphi 0, %s25
      %s28 = sphi 0, %s26
      %s29 = sphi 0, %s27
      %s41 = sphi 0, %s43
      %s44 = sphi 0, %s41
      %s45 = sphi 0, %s44
      %s61 = sphi 0, %s45
      %s69 = sphi 0, %s71
      %s72 = sphi 0, %s69
      %s73 = sphi 0, %s72
      %s89 = sphi 0, %s73
      %s95 = sphi 0, %s97
      %s98 = sphi 0, %s95
      %s99 = sphi 0, %s98
      %s115 = sphi 0, %s99
    $region4: #{tpu_custom_call.1} parent=1 // loop_header_branch
      %20 = sbr.rel (%p18) target = $region8
    $region5: #{tpu_custom_call.1} parent=1 // loop_body
      %s22 = ssub.s32 %s17, 1
      %s23 = ssub.s32 %s17, 2
      %s30 = sadd.s32 1, %s25
      %p31 = scmp.ge.s32.totalorder %s30, 1
      %s32 = scalar_select %p31, 0, %s30
      %s33 = sadd.s32 1, %s24
      %s34 = scalar_select %p31, %s33, %s24
      %p35 = scmp.ge.s32.totalorder %s34, 2
      %s36 = scalar_select %p35, 0, %s34
      %s37 = ssub.s32 %s24, %s36
      %s38 = ssub.s32 %s25, %s32
      %s39 = sor.u32 %s37, %s38
      %p40 = scmp.eq.s32.totalorder %s39, 0
      %s42 = sadd.s32 %s41, 1
      %s43 = scalar_select %p40, %s41, %s42
      %p46 = pneg %p40
      %p47 = scmp.eq.s32.totalorder %s17, 1
      %p48 = por %p46, %p47
      %p49 = scmp.ne.s32.totalorder %s41, %s44
      %p50 = scmp.eq.s32.totalorder %s17, 0
      %p51 = por %p49, %p50
      %p52 = scmp.ne.s32.totalorder %s41, %s44
      %p53 = scmp.eq.s32.totalorder %s22, 1
      %p54 = por %p52, %p53
      %p55 = scmp.ne.s32.totalorder %s44, %s45
      %p56 = scmp.eq.s32.totalorder %s22, 0
      %p57 = por %p55, %p56
      %p58 = scmp.ne.s32.totalorder %s44, %s45
      %p59 = scmp.eq.s32.totalorder %s23, 1
      %p60 = por %p58, %p59
      %p62 = scmp.ne.s32.totalorder %s45, %s61
      %p63 = scmp.eq.s32.totalorder %s23, 0
      %p64 = por %p62, %p63
      %s65 = ssub.s32 %s24, %s36
      %s66 = ssub.s32 %s25, %s32
      %s67 = sor.u32 %s65, %s66
      %p68 = scmp.eq.s32.totalorder %s67, 0
      %s70 = sadd.s32 %s69, 1
      %s71 = scalar_select %p68, %s69, %s70
      %p74 = pneg %p68
      %p75 = scmp.eq.s32.totalorder %s17, 1
      %p76 = por %p74, %p75
      %p77 = scmp.ne.s32.totalorder %s69, %s72
      %p78 = scmp.eq.s32.totalorder %s17, 0
      %p79 = por %p77, %p78
      %p80 = scmp.ne.s32.totalorder %s69, %s72
      %p81 = scmp.eq.s32.totalorder %s22, 1
      %p82 = por %p80, %p81
      %p83 = scmp.ne.s32.totalorder %s72, %s73
      %p84 = scmp.eq.s32.totalorder %s22, 0
      %p85 = por %p83, %p84
      %p86 = scmp.ne.s32.totalorder %s72, %s73
      %p87 = scmp.eq.s32.totalorder %s23, 1
      %p88 = por %p86, %p87
      %p90 = scmp.ne.s32.totalorder %s73, %s89
      %p91 = scmp.eq.s32.totalorder %s23, 0
      %p92 = por %p90, %p91
      %s93 = ssub.s32 %s24, %s36
      %p94 = scmp.eq.s32.totalorder %s93, 0
      %s96 = sadd.s32 %s95, 1
      %s97 = scalar_select %p94, %s95, %s96
      %p100 = pneg %p94
      %p101 = scmp.eq.s32.totalorder %s17, 1
      %p102 = por %p100, %p101
      %p103 = scmp.ne.s32.totalorder %s95, %s98
      %p104 = scmp.eq.s32.totalorder %s17, 0
      %p105 = por %p103, %p104
      %p106 = scmp.ne.s32.totalorder %s95, %s98
      %p107 = scmp.eq.s32.totalorder %s22, 1
      %p108 = por %p106, %p107
      %p109 = scmp.ne.s32.totalorder %s98, %s99
      %p110 = scmp.eq.s32.totalorder %s22, 0
      %p111 = por %p109, %p110
      %p112 = scmp.ne.s32.totalorder %s98, %s99
      %p113 = scmp.eq.s32.totalorder %s23, 1
      %p114 = por %p112, %p113
      %p116 = scmp.ne.s32.totalorder %s99, %s115
      %p117 = scmp.eq.s32.totalorder %s23, 0
      %p118 = por %p116, %p117
      %p119 = scmp.le.s32.totalorder 1, %s17
      %p120 = scmp.lt.s32.totalorder %s17, 3
      %p121 = pnand %p119, %p120
      %p122 = pneg %p121
      // Predicated region
      $region9: #{tpu_custom_call.1} parent=5 // pred_check
        _
      $region10: #{tpu_custom_call.1} parent=5 // pred_check_branch
        %124 = sbr.rel (%p121) target = $region12
      $region11: #{tpu_custom_call.1} parent=5 // pred_region
        %s125 = ssub.s32 %s17, 1
      $region12: #{tpu_custom_call.1} parent=5 // pred_fallthru
        _
      %p126 = scmp.lt.s32.totalorder %s17, 2
      // Predicated region
      $region13: #{tpu_custom_call.1} parent=5 // pred_check
        %p127 = pneg %p126
      $region14: #{tpu_custom_call.1} parent=5 // pred_check_branch
        %129 = sbr.rel (%p127) target = $region16
      $region15: #{tpu_custom_call.1} parent=5 // pred_region
        // Predicated region
        $region17: #{tpu_custom_call.1} parent=15 // pred_check
          %p130 = pneg %p51
        $region18: #{tpu_custom_call.1} parent=15 // pred_check_branch
          %132 = sbr.rel (%p130) target = $region20
        $region19: #{tpu_custom_call.1} parent=15 // pred_region
          %s133 = sand.u32 %s41, 1
          %s134 = scalar_lea.sflag [#allocation3], %s133
          %s135 = sand.u32 %s41, 1
          %s136 = smul.addr %s135, 8
          %s137 = scalar_lea.vmem [#allocation2], %s136
          %s139 = ssub.s32 128, 128
          %140 = vsyncadd %s134, %s139
          %s141 = sadd.s32 %s25, %s24
          %s142 = smul.addr %s141, 128
          %s143 = scalar_lea.hbm %s0, %s142
          %s145 = sshll.u32 %s137, 4
          %s146 = int_to_ptr.vmem [resolvable:$true] %s145
          %148 = dma.hbm_to_vmem [thread:$0]  %s143, 128, %s146, %s134
        $region20: #{tpu_custom_call.1} parent=15 // pred_fallthru
          _
        // Predicated region
        $region21: #{tpu_custom_call.1} parent=15 // pred_check
          %p149 = pneg %p79
        $region22: #{tpu_custom_call.1} parent=15 // pred_check_branch
          %151 = sbr.rel (%p149) target = $region24
        $region23: #{tpu_custom_call.1} parent=15 // pred_region
          %s152 = sand.u32 %s69, 1
          %s153 = scalar_lea.sflag [#allocation6], %s152
          %s154 = sand.u32 %s69, 1
          %s155 = smul.addr %s154, 2
          %s156 = scalar_lea.vmem [#allocation5], %s155
          %s158 = ssub.s32 32, 32
          %159 = vsyncadd %s153, %s158
          %s160 = sadd.s32 %s25, %s24
          %s161 = smul.addr %s160, 32
          %s162 = scalar_lea.hbm %s1, %s161
          %s164 = sshll.u32 %s156, 4
          %s165 = int_to_ptr.vmem [resolvable:$true] %s164
          %167 = dma.hbm_to_vmem [thread:$0]  %s162, 32, %s165, %s153
        $region24: #{tpu_custom_call.1} parent=15 // pred_fallthru
          _
      $region16: #{tpu_custom_call.1} parent=5 // pred_fallthru
        _
      %p168 = scmp.le.s32.totalorder 1, %s17
      %p169 = scmp.lt.s32.totalorder %s17, 3
      %p170 = pnand %p168, %p169
      %p171 = pneg %p170
      // Predicated region
      $region25: #{tpu_custom_call.1} parent=5 // pred_check
        _
      $region26: #{tpu_custom_call.1} parent=5 // pred_check_branch
        %173 = sbr.rel (%p170) target = $region28
      $region27: #{tpu_custom_call.1} parent=5 // pred_region
        %s174 = ssub.s32 %s17, 1
        %s175 = sand.u32 %s44, 1
        %s176 = scalar_lea.sflag [#allocation3], %s175
        %s177 = sand.u32 %s44, 1
        %s178 = smul.addr %s177, 8
        %s179 = scalar_lea.vmem [#allocation2], %s178
        // Predicated region
        $region29: #{tpu_custom_call.1} parent=27 // pred_check
          %p180 = pneg %p57
        $region30: #{tpu_custom_call.1} parent=27 // pred_check_branch
          %182 = sbr.rel (%p180) target = $region32
        $region31: #{tpu_custom_call.1} parent=27 // pred_region
          %183 = dma.done %s176, 128
        $region32: #{tpu_custom_call.1} parent=27 // pred_fallthru
          _
        %s184 = sand.u32 %s72, 1
        %s185 = scalar_lea.sflag [#allocation6], %s184
        %s186 = sand.u32 %s72, 1
        %s187 = smul.addr %s186, 2
        %s188 = scalar_lea.vmem [#allocation5], %s187
        // Predicated region
        $region33: #{tpu_custom_call.1} parent=27 // pred_check
          %p189 = pneg %p85
        $region34: #{tpu_custom_call.1} parent=27 // pred_check_branch
          %191 = sbr.rel (%p189) target = $region36
        $region35: #{tpu_custom_call.1} parent=27 // pred_region
          %192 = dma.done %s185, 32
        $region36: #{tpu_custom_call.1} parent=27 // pred_fallthru
          _
        %s193 = sand.u32 %s44, 1
        %s194 = scalar_lea.sflag [#allocation3], %s193
        %s195 = sand.u32 %s44, 1
        %s196 = smul.addr %s195, 8
        %s197 = scalar_lea.vmem [#allocation2], %s196
        %p198 = pneg %p57
        %p199 = pneg %p54
        %s200 = sand.u32 %s72, 1
        %s201 = scalar_lea.sflag [#allocation6], %s200
        %s202 = sand.u32 %s72, 1
        %s203 = smul.addr %s202, 2
        %s204 = scalar_lea.vmem [#allocation5], %s203
        %p205 = pneg %p85
        %p206 = pneg %p82
        %p207 = pneg %p111
        %p208 = pneg %p108
        %s209 = sand.u32 %s98, 1
        %s210 = scalar_lea.sflag [#allocation4], %s209
        %s211 = sand.u32 %s98, 1
        %s212 = smul.addr %s211, 24
        %s213 = scalar_lea.vmem [#allocation7], %s212
        %p214 = scmp.eq.s32.totalorder %s27, 0
        // Predicated region
        $region37: #{tpu_custom_call.1} parent=27 // pred_check
          %p215 = pneg %p214
        $region38: #{tpu_custom_call.1} parent=27 // pred_check_branch
          %217 = sbr.rel (%p215) target = $region40
        $region39: #{tpu_custom_call.1} parent=27 // pred_region
          %218 = vst [vmem:[%s213] sm:$0xff] 0.0
          %219 = vst [vmem:[%s213 + $0x8] sm:$0xff] 0.0
          %220 = vst [vmem:[%s213 + $0x10] sm:$0xff] 0.0
        $region40: #{tpu_custom_call.1} parent=27 // pred_fallthru
          _
        %v221 = vld [vmem:[%s179] sm:$0xff]
        %v222 = vld [vmem:[%s188] sm:$0x3]
        %v223 = vunpack.c.0.s8 %v222
        %v224 = vcvt.s32.f32 %v223
        %v225 = vmul.f32 %v224, %v221
        %v226 = vsub.f32 1.0, %v224
        %v227 = vsub.f32 1.0, %v221
        %v228 = vmul.f32 %v226, %v227
        %v229 = vadd.f32 %v225, %v228
        %v230 = vlog2.pop %v229
        %v231 = vmul.f32 %v230, 0.6931472
        %v232 = vmax.f32 %v231, -100.0
        %v233 = vsub.f32 0.0, %v232
        %v234 = vsub.f32 1.0, %v229
        %v235 = vmax.f32 %v234, 0.0
        %v236 = vrsqrt.pop %v235
        %v237 = vmul.f32 %v235, %v236
        %vm238 = vcmp.eq.f32.partialorder %v235, inf
        %v239 = vsel %vm238, %v235, %v237
        %vm240 = vcmp.eq.f32.partialorder %v235, 0.0
        %v241 = vand.u32 %v235, 2147483648
        %v242 = vsel %vm240, %v241, %v239
        %v243 = vmul.f32 %v242, %v235
        %v244 = vmul.f32 %v243, %v235
        %v245 = vmul.f32 %v224, %v244
        %v246 = vmul.f32 %v245, %v233
        %v247 = vmul.f32 %v221, 0.5
        %v248 = vtanh.pop %v247
        %v249 = vmul.f32 %v248, 0.5
        %v250 = vadd.f32 %v249, 0.5
        %v251 = vld [vmem:[%s213] sm:$0xff]
        %v252 = vadd.f32 %v246, 0.0
        %v253 = vadd.f32 %v251, %v252
        %254 = vst [vmem:[%s213] sm:$0xff] %v253
        %s255 = scalar_lea.vmem %s213, 8 [#allocation7]
        %v256 = vld [vmem:[%s255] sm:$0xff]
        %v257 = vmul.f32 %v250, %v224
        %v258 = vadd.f32 %v257, 0.0
        %v259 = vadd.f32 %v256, %v258
        %260 = vst [vmem:[%s255] sm:$0xff] %v259
        %s261 = scalar_lea.vmem %s213, 16 [#allocation7]
        %v262 = vld [vmem:[%s261] sm:$0xff]
        %v263 = vadd.f32 %v250, %v224
        %v264 = vadd.f32 %v263, 0.0
        %v265 = vadd.f32 %v262, %v264
        %266 = vst [vmem:[%s261] sm:$0xff] %v265
        %s267 = sand.u32 %s98, 1
        %s268 = scalar_lea.sflag [#allocation4], %s267
        %s269 = sand.u32 %s98, 1
        %s270 = smul.addr %s269, 24
        %s271 = scalar_lea.vmem [#allocation7], %s270
        // Predicated region
        $region41: #{tpu_custom_call.1} parent=27 // pred_check
          %p272 = pneg %p108
        $region42: #{tpu_custom_call.1} parent=27 // pred_check_branch
          %274 = sbr.rel (%p272) target = $region44
        $region43: #{tpu_custom_call.1} parent=27 // pred_region
          %s276 = ssub.s32 384, 384
          %277 = vsyncadd %s268, %s276
          %s278 = smul.addr %s26, 3
          %s279 = smul.addr %s278, 128
          %s280 = scalar_lea.hbm %s2, %s279
          %s281 = sshll.u32 %s271, 4
          %s282 = int_to_ptr.vmem [resolvable:$true] %s281
          %287 = dma.vmem_to_hbm [thread:$0]  %s282, 384, %s280, %s268, 128, 128, 8
        $region44: #{tpu_custom_call.1} parent=27 // pred_fallthru
          _
      $region28: #{tpu_custom_call.1} parent=5 // pred_fallthru
        _
      %p288 = scmp.le.s32.totalorder 2, %s17
      // Predicated region
      $region45: #{tpu_custom_call.1} parent=5 // pred_check
        %p289 = pneg %p288
      $region46: #{tpu_custom_call.1} parent=5 // pred_check_branch
        %291 = sbr.rel (%p289) target = $region48
      $region47: #{tpu_custom_call.1} parent=5 // pred_region
        %s292 = ssub.s32 %s17, 2
        // Predicated region
        $region49: #{tpu_custom_call.1} parent=47 // pred_check
          %p293 = pneg %p114
        $region50: #{tpu_custom_call.1} parent=47 // pred_check_branch
          %295 = sbr.rel (%p293) target = $region52
        $region51: #{tpu_custom_call.1} parent=47 // pred_region
          %s296 = sand.u32 %s99, 1
          %s297 = scalar_lea.sflag [#allocation4], %s296
          %s298 = sand.u32 %s99, 1
          %s299 = smul.addr %s298, 24
          %s300 = scalar_lea.vmem [#allocation7], %s299
          %301 = dma.done %s297, 384
        $region52: #{tpu_custom_call.1} parent=47 // pred_fallthru
          _
      $region48: #{tpu_custom_call.1} parent=5 // pred_fallthru
        _
    $region6: #{tpu_custom_call.1} parent=1 // loop_footer
      %s21 = sadd.s32 1, %s17
    $region7: #{tpu_custom_call.1} parent=1 // loop_footer_branch
      %16 = sbr.rel target = $region3
    $region8: #{tpu_custom_call.1} parent=1 // loop_exit
      _
    %302 = vsyncpa [#allocation3], 1
    %s303 = scalar_lea.sflag [#allocation3], 1
    %304 = vsyncpa %s303, 1
    %305 = vsyncpa [#allocation6], 1
    %s306 = scalar_lea.sflag [#allocation6], 1
    %307 = vsyncpa %s306, 1
    %308 = vsyncpa [#allocation4], 1
    %s309 = scalar_lea.sflag [#allocation4], 1
    %310 = vsyncpa %s309, 1

</llo_original>
